<compile_context>
chip_gen: v5e
topology: v5e:2x2
jax: 0.10.0
libtpu: 0.0.40
codegen_flags: <defaults>
</compile_context>

<pallas_src>
import jax
import jax.numpy as jnp
from jax.experimental import pallas as pl
from jax.experimental.pallas import tpu as pltpu


def _round_up(x, m):
    return ((x + m - 1) // m) * m


def _cdiv(a, b):
    return -(-a // b)


def _vmem_budget_bytes():
    """Per-generation VMEM budget with headroom for Mosaic internal scratch."""
    cap = 64 << 20  # conservative fallback (v7x per-TC VMEM)
    try:
        info = pltpu.get_tpu_info()
        cap = int(getattr(info, "vmem_capacity_bytes", cap) or cap)
    except Exception:
        pass
    return int(cap * 0.6), cap


def _derive_tiles(N, M, D, qk_isz, v_isz, budget, tile_n_pref):
    """Pick (TILE_N, TILE_M) so the double-buffered footprint fits the VMEM budget."""

    def fp(tn, tm):
        return (2 * 2 * tn * D * qk_isz    # q, k input tiles (double-buffered)
                + 2 * D * tm * v_isz       # streamed V^T tile (double-buffered)
                + 2 * tn * tm * 4          # output tile, f32 (double-buffered)
                + 2 * tn * D * 4)          # attention-weights tile, f32 (double-buffered)

    # TILE_N: near-even split of N (avoids ~2x padding waste for N barely above the preference).
    n_splits = max(1, _cdiv(N, tile_n_pref))
    tile_n = _round_up(_cdiv(N, n_splits), 8)

    # TILE_M: largest near-even multiple-of-128 split of M that fits the budget (lane-dense output).
    m_units = max(1, _cdiv(M, 128))
    m_splits = 1
    while m_splits < m_units and fp(tile_n, _cdiv(m_units, m_splits) * 128) > budget:
        m_splits += 1
    tile_m = _cdiv(m_units, m_splits) * 128

    # Still over budget at TILE_M == 128: shrink TILE_N instead.
    while fp(tile_n, tile_m) > budget and tile_n > 8:
        tile_n = _round_up(tile_n // 2, 8)

    return tile_n, tile_m, fp(tile_n, tile_m)


def _add_attention_kernel(q_ref, k_ref, v_ref, out_ref, w_ref):
    # features = tanh(q + k); compute in f32 (cheap VPU upcast, v5e-safe for bf16 storage).
    feats = jnp.tanh(q_ref[...].astype(jnp.float32) + k_ref[...].astype(jnp.float32))

    # valid_len == D (static) -> plain softmax over the last axis. tanh bounds feats to (-1, 1),
    # so exp() cannot overflow and the usual max-subtraction is dead work (skipped).
    e = jnp.exp(feats)
    s = jnp.sum(e, axis=-1, keepdims=True)
    w = e * pl.reciprocal(s, approx=True)            # EUP vrcp + VPU multiply (no full-tile divide)
    w_ref[...] = w.astype(w_ref.dtype)               # attention weights [TILE_N, D]

    # dropout at inference == identity.
    # [TILE_N, D] @ [D, TILE_M] -> [TILE_N, TILE_M]; V was pre-transposed in the wrapper so the MXU
    # consumes it directly (bf16 operands on the bf16 path), accumulating in f32.
    out_ref[...] = jnp.dot(w.astype(v_ref.dtype), v_ref[...],
                           preferred_element_type=jnp.float32)


def add_attention(queries, keys, values, dropout_rate=0.5, *,
                  input_dtype=None, tile_n_pref=1024):
    """AddAttention forward. Returns (output [N, M], attention_weights [N, D])."""
    del dropout_rate  # identity at inference; no learnable parameters / RNG needed

    queries = jnp.asarray(queries)
    keys = jnp.asarray(keys)
    values = jnp.asarray(values)

    N, D = queries.shape
    M, Dv = values.shape
    assert Dv == D, "values must have the same feature width as queries/keys"

    store_dtype = jnp.float32 if input_dtype is None else input_dtype
    q = queries.astype(store_dtype)
    k = keys.astype(store_dtype)
    v = values.astype(store_dtype)
    isz = jnp.dtype(store_dtype).itemsize

    budget, vmem_cap = _vmem_budget_bytes()
    tile_n, tile_m, footprint = _derive_tiles(N, M, D, isz, isz, budget, tile_n_pref)

    N_pad = _round_up(N, tile_n)
    M_pad = _round_up(M, tile_m)

    q_p = jnp.pad(q, ((0, N_pad - N), (0, 0)))
    k_p = jnp.pad(k, ((0, N_pad - N), (0, 0)))
    # One-time HBM transpose in the wrapper: [M, D] -> [D, M_pad] (canonical MXU RHS layout).
    v_t = jnp.pad(v.T, ((0, 0), (0, M_pad - M)))

    grid = (N_pad // tile_n, M_pad // tile_m)

    # Never below the real footprint; never above physical VMEM.
    vmem_limit = min(max(int(1.5 * footprint), 32 << 20), vmem_cap)

    out_p, attn_p = pl.pallas_call(
        _add_attention_kernel,
        out_shape=(
            jax.ShapeDtypeStruct((N_pad, M_pad), jnp.float32),
            jax.ShapeDtypeStruct((N_pad, D), jnp.float32),
        ),
        grid=grid,
        in_specs=[
            pl.BlockSpec((tile_n, D), lambda i, j: (i, 0)),     # queries tile (resident across j)
            pl.BlockSpec((tile_n, D), lambda i, j: (i, 0)),     # keys tile (resident across j)
            pl.BlockSpec((D, tile_m), lambda i, j: (0, j)),     # values^T tile
        ],
        out_specs=(
            pl.BlockSpec((tile_n, tile_m), lambda i, j: (i, j)),  # output (lane-dense, tile_m % 128 == 0)
            pl.BlockSpec((tile_n, D), lambda i, j: (i, 0)),       # attention weights
        ),
        compiler_params=pltpu.CompilerParams(
            dimension_semantics=("parallel", "arbitrary"),
            vmem_limit_bytes=vmem_limit,
        ),
    )(q_p, k_p, v_t)

    return out_p[:N, :M], attn_p[:N, :]


def _reference(queries, keys, values):
    feats = jnp.tanh(queries + keys)
    w = jax.nn.softmax(feats, axis=-1)   # valid_len == D -> mask is all-valid
    return w @ values.T, w


if __name__ == "__main__":
    key = jax.random.PRNGKey(0)
    kq, kk, kv = jax.random.split(key, 3)

    # Small shapes consistent with the module's 2-D forward (queries are (10, 8) in the spec).
    N, D, M = 10, 8, 16
    queries = jax.random.normal(kq, (N, D), dtype=jnp.float32)
    keys = jax.random.normal(kk, (N, D), dtype=jnp.float32)
    values = jax.random.normal(kv, (M, D), dtype=jnp.float32)

    ref_out, ref_w = _reference(queries, keys, values)

    # f32 storage path.
    out, attn = add_attention(queries, keys, values)
    jax.block_until_ready((out, attn))
    assert out.shape == (N, M) and attn.shape == (N, D)
    assert jnp.allclose(out, ref_out, atol=5e-3, rtol=5e-3)
    assert jnp.allclose(attn, ref_w, atol=5e-3, rtol=5e-3)

    # bf16 storage path (memory-bound win on v5e/v6e/v7x); looser tolerance for the narrow dtype.
    out_bf, attn_bf = add_attention(queries, keys, values, input_dtype=jnp.bfloat16)
    jax.block_until_ready((out_bf, attn_bf))
    assert jnp.allclose(out_bf, ref_out, atol=5e-2, rtol=5e-2)
    assert jnp.allclose(attn_bf, ref_w, atol=5e-2, rtol=5e-2)

    print("KERNEL_OK")
</pallas_src>

<mosaic_0001>
module attributes {stable_mosaic.version = 11 : i64} {
  func.func @_add_attention_kernel(%arg0: i32, %arg1: i32, %arg2: memref<16x8xf32, #tpu.memory_space<vmem>>, %arg3: memref<16x8xf32, #tpu.memory_space<vmem>>, %arg4: memref<8x128xf32, #tpu.memory_space<vmem>>, %arg5: memref<16x128xf32, #tpu.memory_space<vmem>>, %arg6: memref<16x8xf32, #tpu.memory_space<vmem>>) attributes {dimension_semantics = [#tpu.dimension_semantics<parallel>, #tpu.dimension_semantics<arbitrary>], iteration_bounds = array<i64: 1, 1>, scalar_prefetch = 0 : i64, scratch_operands = 0 : i64, tpu.core_type = #tpu.core_type<tc>, window_params = [{transform_indices = @transform_0, window_bounds = array<i64: 16, 8>}, {transform_indices = @transform_1, window_bounds = array<i64: 16, 8>}, {transform_indices = @transform_2, window_bounds = array<i64: 8, 128>}, {transform_indices = @transform_3, window_bounds = array<i64: 16, 128>}, {transform_indices = @transform_4, window_bounds = array<i64: 16, 8>}]} {
    %c0 = arith.constant 0 : index
    %c0_0 = arith.constant 0 : index
    %0 = vector.load %arg2[%c0, %c0_0] : memref<16x8xf32, #tpu.memory_space<vmem>>, vector<16x8xf32>
    %c0_1 = arith.constant 0 : index
    %c0_2 = arith.constant 0 : index
    %1 = vector.load %arg3[%c0_1, %c0_2] : memref<16x8xf32, #tpu.memory_space<vmem>>, vector<16x8xf32>
    %2 = arith.addf %0, %1 : vector<16x8xf32>
    %3 = math.tanh %2 : vector<16x8xf32>
    %4 = math.exp %3 : vector<16x8xf32>
    %cst = arith.constant dense<0.000000e+00> : vector<16xf32>
    %5 = vector.multi_reduction <add>, %4, %cst [1] : vector<16x8xf32> to vector<16xf32>
    %6 = vector.shape_cast %5 : vector<16xf32> to vector<16x1xf32>
    %7 = tpu.reciprocal %6 {approx = true} : vector<16x1xf32> -> vector<16x1xf32>
    %8 = vector.broadcast %7 : vector<16x1xf32> to vector<16x8xf32>
    %9 = arith.mulf %4, %8 : vector<16x8xf32>
    %c0_3 = arith.constant 0 : index
    %c0_4 = arith.constant 0 : index
    %10 = vector.load %arg6[%c0_3, %c0_4] : memref<16x8xf32, #tpu.memory_space<vmem>>, vector<16x8xf32>
    tpu.vector_store %arg6[%c0_3, %c0_4], %9 {strides = array<i32>} : memref<16x8xf32, #tpu.memory_space<vmem>>, vector<16x8xf32>,
    %c0_5 = arith.constant 0 : index
    %c0_6 = arith.constant 0 : index
    %11 = vector.load %arg4[%c0_5, %c0_6] : memref<8x128xf32, #tpu.memory_space<vmem>>, vector<8x128xf32>
    %cst_7 = arith.constant dense<0.000000e+00> : vector<16x128xf32>
    %12 = tpu.matmul %9, %11, %cst_7 {dimension_numbers = #tpu.dot_dimension_numbers<[1], [0], [0], [1], [0, 0, 1, 1], [], []>} : vector<16x8xf32>, vector<8x128xf32>, vector<16x128xf32> -> vector<16x128xf32>
    %c0_8 = arith.constant 0 : index
    %c0_9 = arith.constant 0 : index
    %13 = vector.load %arg5[%c0_8, %c0_9] : memref<16x128xf32, #tpu.memory_space<vmem>>, vector<16x128xf32>
    tpu.vector_store %arg5[%c0_8, %c0_9], %12 {strides = array<i32>} : memref<16x128xf32, #tpu.memory_space<vmem>>, vector<16x128xf32>,
    return
  }
  func.func @transform_0(%arg0: i32, %arg1: i32) -> (i32, i32) {
    %c0_i32 = arith.constant 0 : i32
    %c0_i32_0 = arith.constant 0 : i32
    return %arg0, %c0_i32 : i32, i32
  }
  func.func @transform_1(%arg0: i32, %arg1: i32) -> (i32, i32) {
    %c0_i32 = arith.constant 0 : i32
    %c0_i32_0 = arith.constant 0 : i32
    return %arg0, %c0_i32 : i32, i32
  }
  func.func @transform_2(%arg0: i32, %arg1: i32) -> (i32, i32) {
    %c0_i32 = arith.constant 0 : i32
    %c0_i32_0 = arith.constant 0 : i32
    return %c0_i32, %arg1 : i32, i32
  }
  func.func @transform_3(%arg0: i32, %arg1: i32) -> (i32, i32) {
    %c0_i32 = arith.constant 0 : i32
    return %arg0, %arg1 : i32, i32
  }
  func.func @transform_4(%arg0: i32, %arg1: i32) -> (i32, i32) {
    %c0_i32 = arith.constant 0 : i32
    %c0_i32_0 = arith.constant 0 : i32
    return %arg0, %c0_i32 : i32, i32
  }
}

</mosaic_0001>

<llo_original>
// kernel: tpu_custom_call.1
$region0: #{tpu_custom_call.1}
  #allocation0 [shape = 'u32[]', space=smem, size = 0x4, offset = 0x4, fixed_abs, tag = 'smem constant byte address 0x4 - core index']
  #allocation1 [shape = 'u32[72,128]{1,0:T(1,128)}', space=vmem, size = 0x9000, scoped, tag = 'internal scratch']
  %s0 = inlined_call_operand.vmem [shape: f32[16,8], index: 0, kind: input, shape index: {}]
  %s1 = inlined_call_operand.vmem [shape: f32[16,8], index: 1, kind: input, shape index: {}]
  %s2 = inlined_call_operand.vmem [shape: f32[8,128], index: 2, kind: input, shape index: {}]
  %s3 = inlined_call_operand.hbm [shape: f32[16,128], index: 3, kind: output, shape index: {0}]
  %s4 = inlined_call_operand.vmem [shape: f32[16,8], index: 4, kind: output, shape index: {1}]
  %5 = xla_tuple %s3, %s4
  %s6 = sld [smem:[#allocation0]]
  $region30: #{tpu_custom_call.1} parent=0
    _
  %s8 = ssub.s32 1, %s6
  %s9 = scalar_select 0, %s8, %s6
  $region1: #{tpu_custom_call.1} parent=0
    #allocation2 [shape = 'u8[8192]{0}', space=vmem, size = 0x2000, scoped, tag = 'output window, operand 0, single buffered']
    #allocation3 [shape = 's32[1]{0}', space=sflag, size = 0x4, scoped, tag = 'scoped memory for tpu_custom_call.1']
    %10 = vsyncpa [#allocation3], 0
    // Predicated region
    $region2: #{tpu_custom_call.1} parent=1 // pred_check
      _
    $region3: #{tpu_custom_call.1} parent=1 // pred_check_branch
      %12 = sbr.rel (0) target = $region5
    $region4: #{tpu_custom_call.1} parent=1 // pred_region
      _
    $region5: #{tpu_custom_call.1} parent=1 // pred_fallthru
      _
    // Predicated region
    $region6: #{tpu_custom_call.1} parent=1 // pred_check
      _
    $region7: #{tpu_custom_call.1} parent=1 // pred_check_branch
      %14 = sbr.rel (0) target = $region9
    $region8: #{tpu_custom_call.1} parent=1 // pred_region
      _
    $region9: #{tpu_custom_call.1} parent=1 // pred_fallthru
      _
    // Predicated region
    $region10: #{tpu_custom_call.1} parent=1 // pred_check
      _
    $region11: #{tpu_custom_call.1} parent=1 // pred_check_branch
      %16 = sbr.rel (0) target = $region13
    $region12: #{tpu_custom_call.1} parent=1 // pred_region
      _
    $region13: #{tpu_custom_call.1} parent=1 // pred_fallthru
      _
    %v17 = vld [vmem:[%s0] sm:$0xff]
    %v18 = vld [vmem:[%s0 + $0x8] sm:$0xff]
    %v19 = vld [vmem:[%s1] sm:$0xff]
    %v20 = vld [vmem:[%s1 + $0x8] sm:$0xff]
    %v21 = vadd.f32 %v17, %v19
    %v22 = vadd.f32 %v18, %v20
    %v23 = vtanh.pop %v21
    %v24 = vtanh.pop %v22
    %v25 = vmul.f32 %v23, 1.442695
    %v26 = vpow.pop %v25
    %v27 = vmul.f32 %v24, 1.442695
    %v28 = vpow.pop %v27
    %vm29 = vcmask 64512
    %v30 = vsel %vm29, %v26, 0.0
    %31 = vadd.xlane.f32.xlu0 %v30
    %v32 = vpop.xlane.xlu0 %31
    %v33 = vsel %vm29, %v28, 0.0
    %34 = vadd.xlane.f32.xlu0 %v33
    %v35 = vpop.xlane.xlu0 %34
    %v36 = vrcp.pop %v32
    %v37 = vrcp.pop %v35
    %v38 = vmul.f32 %v26, %v36
    %v39 = vmul.f32 %v28, %v37
    %40 = vst.msk [vmem:[%s4] sm:$0xff] %vm29, %v38
    %41 = vst.msk [vmem:[%s4 + $0x8] sm:$0xff] %vm29, %v39
    %v42 = vld [vmem:[%s2] sm:$0xff]
    %v44 = vsel %vm29, %v38, 0
    %v47 = vsel %vm29, %v39, 0
    %49 = vmatpush.msra.mxu0 0.0
    %50 = vmatpush.msra.mxu0 0.0
    %51 = vmatpush.msra.mxu0 0.0
    %52 = vmatpush.msra.mxu0 0.0
    %53 = vmatpush.msra.mxu0 0.0
    %54 = vmatpush.msra.mxu0 0.0
    %55 = vmatpush.msra.mxu0 0.0
    %56 = vmatpush.msra.mxu0 0.0
    %57 = vmatpush.msra.mxu0 0.0
    %58 = vmatpush.msra.mxu0 0.0
    %59 = vmatpush.msra.mxu0 0.0
    %60 = vmatpush.msra.mxu0 0.0
    %61 = vmatpush.msra.mxu0 0.0
    %62 = vmatpush.msra.mxu0 0.0
    %63 = vmatpush.msra.mxu0 0.0
    %64 = vmatpush.msra.mxu0 %v42
    %65 = vmatmul.f32.gmra.mxu0 %v44
    %v66 = vpop.f32.mrf.mxu0
    %v67 = vadd.f32 0.0, %v66
    %68 = vmatmul.f32.gmra.mxu0 %v47
    %v69 = vpop.f32.mrf.mxu0
    %v70 = vadd.f32 0.0, %v69
    %71 = vdwg.mxu0
    %72 = vst [vmem:[#allocation2] sm:$0xff] %v67
    %73 = vst [vmem:[#allocation2 + $0x8] sm:$0xff] %v70
    // Predicated region
    $region14: #{tpu_custom_call.1} parent=1 // pred_check
      _
    $region15: #{tpu_custom_call.1} parent=1 // pred_check_branch
      %75 = sbr.rel (0) target = $region17
    $region16: #{tpu_custom_call.1} parent=1 // pred_region
      %77 = vsyncadd [#allocation3], 0
      %s78 = sshll.u32 [#allocation2], 4
      %s79 = int_to_ptr.vmem [resolvable:$true] %s78
      %s80 = sshll.u32 %s3, 4
      %s81 = int_to_ptr.hbm [resolvable:$true] %s80
      %86 = dma.vmem_to_hbm [thread:$0]  %s79, 256, %s81, [#allocation3], 128, 128, 8
    $region17: #{tpu_custom_call.1} parent=1 // pred_fallthru
      _
    // Predicated region
    $region18: #{tpu_custom_call.1} parent=1 // pred_check
      _
    $region19: #{tpu_custom_call.1} parent=1 // pred_check_branch
      %88 = sbr.rel (0) target = $region21
    $region20: #{tpu_custom_call.1} parent=1 // pred_region
      _
    $region21: #{tpu_custom_call.1} parent=1 // pred_fallthru
      _
    // Predicated region
    $region22: #{tpu_custom_call.1} parent=1 // pred_check
      _
    $region23: #{tpu_custom_call.1} parent=1 // pred_check_branch
      %90 = sbr.rel (0) target = $region25
    $region24: #{tpu_custom_call.1} parent=1 // pred_region
      %92 = dma.done [#allocation3], 256
    $region25: #{tpu_custom_call.1} parent=1 // pred_fallthru
      _
    // Predicated region
    $region26: #{tpu_custom_call.1} parent=1 // pred_check
      _
    $region27: #{tpu_custom_call.1} parent=1 // pred_check_branch
      %94 = sbr.rel (0) target = $region29
    $region28: #{tpu_custom_call.1} parent=1 // pred_region
      _
    $region29: #{tpu_custom_call.1} parent=1 // pred_fallthru
      _
    %95 = vsyncpa [#allocation3], 1

</llo_original>
